<compile_context>
chip_gen: v5e
topology: v5e:2x2
jax: 0.10.0
libtpu: 0.0.40
codegen_flags: <defaults>
</compile_context>

<pallas_src>
import jax
import jax.numpy as jnp
from jax.experimental import pallas as pl
from jax.experimental.pallas import tpu as pltpu

MAX_NORM = 0.25
RENORM_EPS = 1e-7          # torch.renorm uses maxnorm / (norm + 1e-7) when norm > maxnorm
_LANES = 128
_SUBLANES = 8
_VMEM_BUDGET_BYTES = 16 * 1024 * 1024   # well under 32 MiB scoped default on all chips
_TINY_FLOP_THRESHOLD = 1 << 17          # below this, XLA's fused matmul wins vs kernel launch cost


def _round_up(x, m):
    return ((x + m - 1) // m) * m


def _fused_heads_kernel(x_ref, wt_ref, b_ref, z_ref):
    # x_ref: (TB, F)   wt_ref: (F, Npad)   b_ref: (1, Npad) f32   z_ref: (TB, Npad)
    z = jnp.dot(x_ref[...], wt_ref[...], preferred_element_type=jnp.float32)
    z_ref[...] = (z + b_ref[...]).astype(z_ref.dtype)


def _renorm_rows(w):
    # torch.renorm(w, p=2, dim=0, maxnorm=MAX_NORM): clip each row's L2 norm to <= MAX_NORM.
    w32 = w.astype(jnp.float32)
    norm = jnp.sqrt(jnp.sum(w32 * w32, axis=1, keepdims=True))      # (C, 1)
    scale = jnp.where(norm > MAX_NORM, MAX_NORM / (norm + RENORM_EPS), 1.0)
    return (w32 * scale).astype(w.dtype)


def _choose_batch_tile(B, F, n_pad, itemsize, block_b):
    # Per batch row: double-buffered x tile + double-buffered output tile.
    per_row = 2 * (F + n_pad) * itemsize
    # Resident weight (double-buffered by default; constant index_map so no re-fetch) + bias.
    resident = 2 * F * n_pad * itemsize + 2 * n_pad * 4
    tb_cap = max(_SUBLANES, (_VMEM_BUDGET_BYTES - resident) // max(per_row, 1))
    tb = min(block_b, tb_cap)
    tb = max(_SUBLANES, (tb // _SUBLANES) * _SUBLANES)
    b_ceil = _round_up(B, _SUBLANES)
    if tb >= b_ceil:
        # Whole batch fits in one tile.  Split into two grid steps when there is enough
        # work so v7x's second TensorCore gets a share of the "parallel" axis.
        if b_ceil >= 2 * _SUBLANES:
            tb = _round_up((B + 1) // 2, _SUBLANES)
        else:
            tb = b_ceil
    return tb


def pair_classifiers_forward(x, w1, b1, w2, b2, *, block_b=1024, use_pallas=None):
    """PairClassifiers forward.  x: (B, F); w*: (C, F); b*: (C,).  Returns (z1, z2), each (B, C)."""
    B, F = x.shape
    C = w1.shape[0]
    n = 2 * C

    # Forward-time renorm (LinearWithConstraint semantics), fused across heads and hoisted
    # out of the per-tile hot path.
    w = jnp.concatenate([_renorm_rows(w1), _renorm_rows(w2)], axis=0)   # (2C, F)
    bias = jnp.concatenate([b1, b2]).astype(jnp.float32)                # (2C,) f32

    if use_pallas is None:
        use_pallas = (2 * B * F * n) >= _TINY_FLOP_THRESHOLD
    if not use_pallas:
        # Tiny problem: pallas_call fixed cost (launch, DMA setup, ~0.35us/step) dwarfs the work.
        z = (jnp.dot(x, w.T.astype(x.dtype)) + bias[None, :]).astype(x.dtype)
        return z[:, :C], z[:, C:n]

    # Lane-dense output: pad N (=2C) up to a multiple of 128 so stores are unmasked.
    n_pad = _round_up(n, _LANES)
    wt = jnp.zeros((F, n_pad), dtype=w.dtype).at[:, :n].set(w.T)        # (F, Npad), resident
    b_row = jnp.zeros((1, n_pad), dtype=jnp.float32).at[:, :n].set(bias[None, :])

    itemsize = jnp.dtype(x.dtype).itemsize
    tb = _choose_batch_tile(B, F, n_pad, itemsize, block_b)
    grid = (pl.cdiv(B, tb),)   # ragged last tile handled by Pallas clamping (no host-side pad)

    cost = pl.CostEstimate(
        flops=2 * B * F * n_pad,
        transcendentals=0,
        bytes_accessed=itemsize * (B * F + B * n_pad) + 4 * F * n_pad,
    )

    z = pl.pallas_call(
        _fused_heads_kernel,
        out_shape=jax.ShapeDtypeStruct((B, n_pad), x.dtype),
        grid_spec=pl.GridSpec(
            grid=grid,
            in_specs=[
                pl.BlockSpec((tb, F), lambda i: (i, 0)),        # x: tiled over batch
                pl.BlockSpec((F, n_pad), lambda i: (0, 0)),     # W.T: constant index -> resident
                pl.BlockSpec((1, n_pad), lambda i: (0, 0)),     # bias (f32): resident
            ],
            out_specs=pl.BlockSpec((tb, n_pad), lambda i: (i, 0)),
        ),
        compiler_params=pltpu.CompilerParams(
            dimension_semantics=("parallel",)),                 # megacore-shardable on v7x
        cost_estimate=cost,
    )(x, wt, b_row)

    return z[:, :C], z[:, C:n]


def _reference(x, w1, b1, w2, b2):
    def head(w, bias):
        w32 = w.astype(jnp.float32)
        norm = jnp.sqrt(jnp.sum(w32 * w32, axis=1, keepdims=True))
        scale = jnp.where(norm > MAX_NORM, MAX_NORM / (norm + RENORM_EPS), 1.0)
        return x @ (w32 * scale).astype(w.dtype).T + bias
    return head(w1, b1), head(w2, b2)


if __name__ == "__main__":
    FDIM, NUM_CLASSES = 32, 4

    key = jax.random.PRNGKey(0)
    kx, kw1, kb1, kw2, kb2, kx2 = jax.random.split(key, 6)
    # Deterministic synthetic parameters (not a checkpoint load).
    w1 = jax.random.normal(kw1, (NUM_CLASSES, FDIM), dtype=jnp.float32) * 0.2
    b1 = jax.random.normal(kb1, (NUM_CLASSES,), dtype=jnp.float32) * 0.1
    w2 = jax.random.normal(kw2, (NUM_CLASSES, FDIM), dtype=jnp.float32) * 0.2
    b2 = jax.random.normal(kb2, (NUM_CLASSES,), dtype=jnp.float32) * 0.1

    # 1) Module's nominal tiny shape (batch=8), forced through the Pallas kernel.
    x_small = jax.random.normal(kx, (8, FDIM), dtype=jnp.float32)
    z1, z2 = pair_classifiers_forward(x_small, w1, b1, w2, b2, use_pallas=True)
    jax.block_until_ready((z1, z2))
    r1, r2 = _reference(x_small, w1, b1, w2, b2)
    assert z1.shape == (8, NUM_CLASSES) and z2.shape == (8, NUM_CLASSES)
    assert jnp.allclose(z1, r1, atol=1e-5, rtol=1e-5), "small z1 mismatch"
    assert jnp.allclose(z2, r2, atol=1e-5, rtol=1e-5), "small z2 mismatch"

    # Auto-dispatch at the tiny shape takes the plain-jnp fast path; check it too.
    z1s, z2s = pair_classifiers_forward(x_small, w1, b1, w2, b2)
    jax.block_until_ready((z1s, z2s))
    assert jnp.allclose(z1s, r1, atol=1e-5, rtol=1e-5), "fast-path z1 mismatch"
    assert jnp.allclose(z2s, r2, atol=1e-5, rtol=1e-5), "fast-path z2 mismatch"

    # 2) Larger, tile-unaligned batch: exercises the 2-step parallel grid and the ragged
    #    last block (no host-side padding copy of x).
    x_big = jax.random.normal(kx2, (1000, FDIM), dtype=jnp.float32)
    z1b, z2b = pair_classifiers_forward(x_big, w1, b1, w2, b2)
    jax.block_until_ready((z1b, z2b))
    r1b, r2b = _reference(x_big, w1, b1, w2, b2)
    assert z1b.shape == (1000, NUM_CLASSES) and z2b.shape == (1000, NUM_CLASSES)
    assert jnp.allclose(z1b, r1b, atol=1e-4, rtol=1e-4), "big z1 mismatch"
    assert jnp.allclose(z2b, r2b, atol=1e-4, rtol=1e-4), "big z2 mismatch"

    print("KERNEL_OK")
</pallas_src>

<mosaic_0001>
module attributes {stable_mosaic.version = 11 : i64} {
  func.func @_fused_heads_kernel(%arg0: i32, %arg1: memref<8x32xf32, #tpu.memory_space<vmem>>, %arg2: memref<32x128xf32, #tpu.memory_space<vmem>>, %arg3: memref<1x128xf32, #tpu.memory_space<vmem>>, %arg4: memref<8x128xf32, #tpu.memory_space<vmem>>) attributes {dimension_semantics = [#tpu.dimension_semantics<parallel>], iteration_bounds = array<i64: 1>, scalar_prefetch = 0 : i64, scratch_operands = 0 : i64, tpu.core_type = #tpu.core_type<tc>, window_params = [{transform_indices = @transform_0, window_bounds = array<i64: 8, 32>}, {pipeline_mode = #tpu.pipeline_mode<synchronous>, transform_indices = @transform_1, window_bounds = array<i64: 32, 128>}, {pipeline_mode = #tpu.pipeline_mode<synchronous>, transform_indices = @transform_2, window_bounds = array<i64: 1, 128>}, {transform_indices = @transform_3, window_bounds = array<i64: 8, 128>}]} {
    %c0 = arith.constant 0 : index
    %c0_0 = arith.constant 0 : index
    %0 = vector.load %arg1[%c0, %c0_0] : memref<8x32xf32, #tpu.memory_space<vmem>>, vector<8x32xf32>
    %c0_1 = arith.constant 0 : index
    %c0_2 = arith.constant 0 : index
    %1 = vector.load %arg2[%c0_1, %c0_2] : memref<32x128xf32, #tpu.memory_space<vmem>>, vector<32x128xf32>
    %cst = arith.constant dense<0.000000e+00> : vector<8x128xf32>
    %2 = tpu.matmul %0, %1, %cst {dimension_numbers = #tpu.dot_dimension_numbers<[1], [0], [0], [1], [0, 0, 1, 1], [], []>} : vector<8x32xf32>, vector<32x128xf32>, vector<8x128xf32> -> vector<8x128xf32>
    %c0_3 = arith.constant 0 : index
    %c0_4 = arith.constant 0 : index
    %3 = vector.load %arg3[%c0_3, %c0_4] : memref<1x128xf32, #tpu.memory_space<vmem>>, vector<1x128xf32>
    %4 = vector.broadcast %3 : vector<1x128xf32> to vector<8x128xf32>
    %5 = arith.addf %2, %4 : vector<8x128xf32>
    %c0_5 = arith.constant 0 : index
    %c0_6 = arith.constant 0 : index
    %6 = vector.load %arg4[%c0_5, %c0_6] : memref<8x128xf32, #tpu.memory_space<vmem>>, vector<8x128xf32>
    tpu.vector_store %arg4[%c0_5, %c0_6], %5 {strides = array<i32>} : memref<8x128xf32, #tpu.memory_space<vmem>>, vector<8x128xf32>,
    return
  }
  func.func @transform_0(%arg0: i32) -> (i32, i32) {
    %c0_i32 = arith.constant 0 : i32
    %c0_i32_0 = arith.constant 0 : i32
    return %arg0, %c0_i32 : i32, i32
  }
  func.func @transform_1(%arg0: i32) -> (i32, i32) {
    %c0_i32 = arith.constant 0 : i32
    %c0_i32_0 = arith.constant 0 : i32
    %c0_i32_1 = arith.constant 0 : i32
    return %c0_i32, %c0_i32_0 : i32, i32
  }
  func.func @transform_2(%arg0: i32) -> (i32, i32) {
    %c0_i32 = arith.constant 0 : i32
    %c0_i32_0 = arith.constant 0 : i32
    %c0_i32_1 = arith.constant 0 : i32
    return %c0_i32, %c0_i32_0 : i32, i32
  }
  func.func @transform_3(%arg0: i32) -> (i32, i32) {
    %c0_i32 = arith.constant 0 : i32
    %c0_i32_0 = arith.constant 0 : i32
    return %arg0, %c0_i32 : i32, i32
  }
}

</mosaic_0001>

<llo_original>
// kernel: tpu_custom_call.1
$region0: #{tpu_custom_call.1}
  #allocation0 [shape = 'u32[]', space=smem, size = 0x4, offset = 0x4, fixed_abs, tag = 'smem constant byte address 0x4 - core index']
  #allocation1 [shape = 'u32[72,128]{1,0:T(1,128)}', space=vmem, size = 0x9000, scoped, tag = 'internal scratch']
  %s0 = inlined_call_operand.hbm [shape: f32[8,32], index: 0, kind: input, shape index: {}]
  %s1 = inlined_call_operand.hbm [shape: f32[32,128], index: 1, kind: input, shape index: {}]
  %s2 = inlined_call_operand.vmem [shape: f32[1,128], index: 2, kind: input, shape index: {}]
  %s3 = inlined_call_operand.hbm [shape: f32[8,128], index: 3, kind: output, shape index: {}]
  %s4 = sld [smem:[#allocation0]]
  $region30: #{tpu_custom_call.1} parent=0
    _
  %s6 = ssub.s32 1, %s4
  %s7 = scalar_select 0, %s6, %s4
  $region1: #{tpu_custom_call.1} parent=0
    #allocation2 [shape = 'u8[4096]{0}', space=vmem, size = 0x1000, scoped, tag = 'input window, operand 0, single buffered']
    #allocation3 [shape = 's32[1]{0}', space=sflag, size = 0x4, scoped, tag = 'scoped memory for tpu_custom_call.1']
    #allocation4 [shape = 's32[1]{0}', space=sflag, size = 0x4, scoped, tag = 'scoped memory for tpu_custom_call.1']
    #allocation5 [shape = 'u8[16384]{0}', space=vmem, size = 0x4000, scoped, tag = 'input window, operand 1, single buffered']
    #allocation6 [shape = 's32[1]{0}', space=sflag, size = 0x4, scoped, tag = 'scoped memory for tpu_custom_call.1']
    #allocation7 [shape = 'u8[4096]{0}', space=vmem, size = 0x1000, scoped, tag = 'output window, operand 0, single buffered']
    %8 = vsyncpa [#allocation3], 0
    %9 = vsyncpa [#allocation6], 0
    %10 = vsyncpa [#allocation4], 0
    // Predicated region
    $region2: #{tpu_custom_call.1} parent=1 // pred_check
      _
    $region3: #{tpu_custom_call.1} parent=1 // pred_check_branch
      %12 = sbr.rel (0) target = $region5
    $region4: #{tpu_custom_call.1} parent=1 // pred_region
      %14 = vsyncadd [#allocation3], 0
      %s16 = sshll.u32 %s0, 4
      %s17 = int_to_ptr.hbm [resolvable:$true] %s16
      %s18 = sshll.u32 [#allocation2], 4
      %s19 = int_to_ptr.vmem [resolvable:$true] %s18
      %21 = dma.hbm_to_vmem [thread:$0]  %s17, 128, %s19, [#allocation3]
    $region5: #{tpu_custom_call.1} parent=1 // pred_fallthru
      _
    // Predicated region
    $region6: #{tpu_custom_call.1} parent=1 // pred_check
      _
    $region7: #{tpu_custom_call.1} parent=1 // pred_check_branch
      %23 = sbr.rel (0) target = $region9
    $region8: #{tpu_custom_call.1} parent=1 // pred_region
      %25 = vsyncadd [#allocation6], 0
      %s26 = sshll.u32 %s1, 4
      %s27 = int_to_ptr.hbm [resolvable:$true] %s26
      %s28 = sshll.u32 [#allocation5], 4
      %s29 = int_to_ptr.vmem [resolvable:$true] %s28
      %34 = dma.hbm_to_vmem [thread:$0]  %s27, 512, %s29, [#allocation6], 128, 128, 8
    $region9: #{tpu_custom_call.1} parent=1 // pred_fallthru
      _
    // Predicated region
    $region10: #{tpu_custom_call.1} parent=1 // pred_check
      _
    $region11: #{tpu_custom_call.1} parent=1 // pred_check_branch
      %36 = sbr.rel (0) target = $region13
    $region12: #{tpu_custom_call.1} parent=1 // pred_region
      _
    $region13: #{tpu_custom_call.1} parent=1 // pred_fallthru
      _
    // Predicated region
    $region14: #{tpu_custom_call.1} parent=1 // pred_check
      _
    $region15: #{tpu_custom_call.1} parent=1 // pred_check_branch
      %38 = sbr.rel (0) target = $region17
    $region16: #{tpu_custom_call.1} parent=1 // pred_region
      %40 = dma.done [#allocation3], 128
    $region17: #{tpu_custom_call.1} parent=1 // pred_fallthru
      _
    // Predicated region
    $region18: #{tpu_custom_call.1} parent=1 // pred_check
      _
    $region19: #{tpu_custom_call.1} parent=1 // pred_check_branch
      %42 = sbr.rel (0) target = $region21
    $region20: #{tpu_custom_call.1} parent=1 // pred_region
      %44 = dma.done [#allocation6], 512
    $region21: #{tpu_custom_call.1} parent=1 // pred_fallthru
      _
    %v45 = vld [vmem:[#allocation2] sm:$0xff]
    %v46 = vld [vmem:[#allocation5] sm:$0xff]
    %v47 = vld [vmem:[#allocation5 + $0x8] sm:$0xff]
    %v48 = vld [vmem:[#allocation5 + $0x10] sm:$0xff]
    %v49 = vld [vmem:[#allocation5 + $0x18] sm:$0xff]
    %v50 = vld [vmem:[%s2] sm:$0x1]
    %v52 = vperm.slane %v50, 0
    %vm54 = vcmask 261120
    %v56 = vsel %vm54, %v45, 0
    %58 = vmatpush.msra.mxu0 0.0
    %59 = vmatpush.msra.mxu0 0.0
    %60 = vmatpush.msra.mxu0 0.0
    %61 = vmatpush.msra.mxu0 0.0
    %62 = vmatpush.msra.mxu0 0.0
    %63 = vmatpush.msra.mxu0 0.0
    %64 = vmatpush.msra.mxu0 0.0
    %65 = vmatpush.msra.mxu0 0.0
    %66 = vmatpush.msra.mxu0 0.0
    %67 = vmatpush.msra.mxu0 0.0
    %68 = vmatpush.msra.mxu0 0.0
    %69 = vmatpush.msra.mxu0 0.0
    %70 = vmatpush.msra.mxu0 %v49
    %71 = vmatpush.msra.mxu0 %v48
    %72 = vmatpush.msra.mxu0 %v47
    %73 = vmatpush.msra.mxu0 %v46
    %74 = vmatmul.f32.gmra.mxu0 %v56
    %v75 = vpop.f32.mrf.mxu0
    %v76 = vadd.f32 %v52, %v75
    %77 = vdwg.mxu0
    %78 = vst [vmem:[#allocation7] sm:$0xff] %v76
    // Predicated region
    $region22: #{tpu_custom_call.1} parent=1 // pred_check
      _
    $region23: #{tpu_custom_call.1} parent=1 // pred_check_branch
      %80 = sbr.rel (0) target = $region25
    $region24: #{tpu_custom_call.1} parent=1 // pred_region
      %82 = vsyncadd [#allocation4], 0
      %s84 = sshll.u32 [#allocation7], 4
      %s85 = int_to_ptr.vmem [resolvable:$true] %s84
      %s86 = sshll.u32 %s3, 4
      %s87 = int_to_ptr.hbm [resolvable:$true] %s86
      %89 = dma.vmem_to_hbm [thread:$0]  %s85, 128, %s87, [#allocation4]
    $region25: #{tpu_custom_call.1} parent=1 // pred_fallthru
      _
    // Predicated region
    $region26: #{tpu_custom_call.1} parent=1 // pred_check
      _
    $region27: #{tpu_custom_call.1} parent=1 // pred_check_branch
      %91 = sbr.rel (0) target = $region29
    $region28: #{tpu_custom_call.1} parent=1 // pred_region
      %93 = dma.done [#allocation4], 128
    $region29: #{tpu_custom_call.1} parent=1 // pred_fallthru
      _
    %94 = vsyncpa [#allocation3], 1
    %95 = vsyncpa [#allocation6], 1
    %96 = vsyncpa [#allocation4], 1

</llo_original>
